<compile_context>
chip_gen: v6e
topology: v6e:2x2x1
jax: 0.10.0
libtpu: 0.0.40
codegen_flags: <defaults>
</compile_context>

<pallas_src>
import functools

import jax
import jax.numpy as jnp
from jax import lax
from jax.experimental import pallas as pl
from jax.experimental.pallas import tpu as pltpu


def _ceil_to(a: int, b: int) -> int:
    return ((a + b - 1) // b) * b


def _linear_kernel_acc(x_ref, w_ref, b_ref, o_ref, acc_ref):
    # x_ref : (tm, tk)  VMEM tile of x
    # w_ref : (tn, tk)  VMEM tile of the UNtransposed weight [P, F]
    # b_ref : (1, tn)   VMEM tile of the bias
    # o_ref : (tm, tn)  output tile
    # acc_ref: (tm, tn) f32 accumulator scratch (lives across the K grid axis)
    k = pl.program_id(2)

    @pl.when(k == 0)
    def _():
        acc_ref[...] = jnp.zeros_like(acc_ref)

    # Contract x's last dim against weight's last dim: (tm,tk) x (tn,tk) -> (tm,tn).
    acc_ref[...] += lax.dot_general(
        x_ref[...], w_ref[...],
        dimension_numbers=(((1,), (1,)), ((), ())),
        preferred_element_type=jnp.float32)

    @pl.when(k == pl.num_programs(2) - 1)
    def _():
        out = acc_ref[...] + b_ref[...].astype(jnp.float32)  # (1,tn) broadcasts
        o_ref[...] = out.astype(o_ref.dtype)


def _linear_kernel_single(x_ref, w_ref, b_ref, o_ref):
    # Single-K-step fast path: no scratch accumulator needed.
    acc = lax.dot_general(
        x_ref[...], w_ref[...],
        dimension_numbers=(((1,), (1,)), ((), ())),
        preferred_element_type=jnp.float32)
    o_ref[...] = (acc + b_ref[...].astype(jnp.float32)).astype(o_ref.dtype)


@functools.partial(jax.jit, static_argnames=("tm", "tn", "tk"))
def feature_projection(x, weight, bias, *, tm=512, tn=512, tk=512):
    """y = x @ weight.T + bias  (torch.nn.Linear semantics).

    x:      [..., in_features]
    weight: [projection_dim, in_features]
    bias:   [projection_dim]
    """
    in_features = x.shape[-1]
    projection_dim = weight.shape[0]
    lead_shape = x.shape[:-1]
    m = 1
    for d in lead_shape:
        m *= d

    x2d = x.reshape(m, in_features)

    # Tile sizes: tm multiple of 8, tn/tk multiples of 128, capped at padded dims.
    tm_ = min(tm, _ceil_to(m, 8))
    tn_ = min(tn, _ceil_to(projection_dim, 128))
    tk_ = min(tk, _ceil_to(in_features, 128))

    mp = _ceil_to(m, tm_)
    pp = _ceil_to(projection_dim, tn_)
    fp = _ceil_to(in_features, tk_)

    # Zero-pad only when needed so every block is full and output stores are lane-dense.
    # Zero padding on K contributes nothing to the dot; padded M/P rows/cols are sliced away.
    xp = x2d
    if (mp != m) or (fp != in_features):
        xp = jnp.pad(x2d, ((0, mp - m), (0, fp - in_features)))
    wp = weight
    if (pp != projection_dim) or (fp != in_features):
        wp = jnp.pad(weight, ((0, pp - projection_dim), (0, fp - in_features)))
    bp = bias
    if pp != projection_dim:
        bp = jnp.pad(bias, (0, pp - projection_dim))
    bp = bp.reshape(1, pp)

    nk = fp // tk_

    cost = pl.CostEstimate(
        flops=2 * m * in_features * projection_dim,
        transcendentals=0,
        bytes_accessed=(xp.size * xp.dtype.itemsize
                        + wp.size * wp.dtype.itemsize
                        + bp.size * bp.dtype.itemsize
                        + mp * pp * x.dtype.itemsize),
    )

    if nk == 1:
        # Entire contraction fits in one K tile: 2-D grid, no scratch accumulator.
        out = pl.pallas_call(
            _linear_kernel_single,
            out_shape=jax.ShapeDtypeStruct((mp, pp), x.dtype),
            grid_spec=pltpu.PrefetchScalarGridSpec(
                num_scalar_prefetch=0,
                grid=(mp // tm_, pp // tn_),
                in_specs=[
                    pl.BlockSpec((tm_, tk_), lambda i, j: (i, 0)),  # x
                    pl.BlockSpec((tn_, tk_), lambda i, j: (j, 0)),  # weight (untransposed)
                    pl.BlockSpec((1, tn_), lambda i, j: (0, j)),    # bias
                ],
                out_specs=pl.BlockSpec((tm_, tn_), lambda i, j: (i, j)),
            ),
            compiler_params=pltpu.CompilerParams(
                dimension_semantics=("parallel", "parallel"),
                vmem_limit_bytes=48 * 1024 * 1024,
            ),
            cost_estimate=cost,
        )(xp, wp, bp)
    else:
        out = pl.pallas_call(
            _linear_kernel_acc,
            out_shape=jax.ShapeDtypeStruct((mp, pp), x.dtype),
            grid_spec=pltpu.PrefetchScalarGridSpec(
                num_scalar_prefetch=0,
                grid=(mp // tm_, pp // tn_, nk),
                in_specs=[
                    pl.BlockSpec((tm_, tk_), lambda i, j, k: (i, k)),  # x
                    pl.BlockSpec((tn_, tk_), lambda i, j, k: (j, k)),  # weight (untransposed)
                    pl.BlockSpec((1, tn_), lambda i, j, k: (0, j)),    # bias
                ],
                out_specs=pl.BlockSpec((tm_, tn_), lambda i, j, k: (i, j)),
                scratch_shapes=[pltpu.VMEM((tm_, tn_), jnp.float32)],
            ),
            compiler_params=pltpu.CompilerParams(
                dimension_semantics=("parallel", "parallel", "arbitrary"),
                vmem_limit_bytes=48 * 1024 * 1024,
            ),
            cost_estimate=cost,
        )(xp, wp, bp)

    out = out[:m, :projection_dim]
    return out.reshape(*lead_shape, projection_dim)


def init_linear_params(key, in_features, projection_dim, dtype=jnp.float32):
    # Deterministic init mimicking torch.nn.Linear's default
    # (uniform in [-1/sqrt(fan_in), 1/sqrt(fan_in)]).
    kw, kb = jax.random.split(key)
    bound = 1.0 / (in_features ** 0.5)
    weight = jax.random.uniform(kw, (projection_dim, in_features),
                                minval=-bound, maxval=bound, dtype=dtype)
    bias = jax.random.uniform(kb, (projection_dim,),
                              minval=-bound, maxval=bound, dtype=dtype)
    return weight, bias


if __name__ == "__main__":
    key = jax.random.PRNGKey(0)
    kx, kp = jax.random.split(key)

    batch, seq, in_features, projection_dim = 2, 8, 32, 64
    x = jax.random.normal(kx, (batch, seq, in_features), dtype=jnp.float32)
    weight, bias = init_linear_params(kp, in_features, projection_dim)

    y = feature_projection(x, weight, bias)
    y = jax.block_until_ready(y)

    # Reference check against plain JAX (same semantics as torch.nn.Linear).
    y_ref = x @ weight.T + bias
    assert y.shape == (batch, seq, projection_dim)
    assert jnp.allclose(y, y_ref, atol=1e-5, rtol=1e-5)

    print("KERNEL_OK")
</pallas_src>

<mosaic_0001>
module attributes {stable_mosaic.version = 11 : i64} {
  func.func @_linear_kernel_single(%arg0: i32, %arg1: i32, %arg2: memref<16x128xf32, #tpu.memory_space<vmem>>, %arg3: memref<128x128xf32, #tpu.memory_space<vmem>>, %arg4: memref<1x128xf32, #tpu.memory_space<vmem>>, %arg5: memref<16x128xf32, #tpu.memory_space<vmem>>) attributes {dimension_semantics = [#tpu.dimension_semantics<parallel>, #tpu.dimension_semantics<parallel>], iteration_bounds = array<i64: 1, 1>, scalar_prefetch = 0 : i64, scratch_operands = 0 : i64, tpu.core_type = #tpu.core_type<tc>, window_params = [{transform_indices = @transform_0, window_bounds = array<i64: 16, 128>}, {transform_indices = @transform_1, window_bounds = array<i64: 128, 128>}, {transform_indices = @transform_2, window_bounds = array<i64: 1, 128>}, {transform_indices = @transform_3, window_bounds = array<i64: 16, 128>}]} {
    %c0 = arith.constant 0 : index
    %c0_0 = arith.constant 0 : index
    %0 = vector.load %arg2[%c0, %c0_0] : memref<16x128xf32, #tpu.memory_space<vmem>>, vector<16x128xf32>
    %c0_1 = arith.constant 0 : index
    %c0_2 = arith.constant 0 : index
    %1 = vector.load %arg3[%c0_1, %c0_2] : memref<128x128xf32, #tpu.memory_space<vmem>>, vector<128x128xf32>
    %cst = arith.constant dense<0.000000e+00> : vector<16x128xf32>
    %2 = tpu.matmul %0, %1, %cst {dimension_numbers = #tpu.dot_dimension_numbers<[1], [1], [0], [0], [0, 0, 1, 0], [], []>} : vector<16x128xf32>, vector<128x128xf32>, vector<16x128xf32> -> vector<16x128xf32>
    %c0_3 = arith.constant 0 : index
    %c0_4 = arith.constant 0 : index
    %3 = vector.load %arg4[%c0_3, %c0_4] : memref<1x128xf32, #tpu.memory_space<vmem>>, vector<1x128xf32>
    %4 = vector.broadcast %3 : vector<1x128xf32> to vector<16x128xf32>
    %5 = arith.addf %2, %4 : vector<16x128xf32>
    %c0_5 = arith.constant 0 : index
    %c0_6 = arith.constant 0 : index
    %6 = vector.load %arg5[%c0_5, %c0_6] : memref<16x128xf32, #tpu.memory_space<vmem>>, vector<16x128xf32>
    tpu.vector_store %arg5[%c0_5, %c0_6], %5 {strides = array<i32>} : memref<16x128xf32, #tpu.memory_space<vmem>>, vector<16x128xf32>,
    return
  }
  func.func @transform_0(%arg0: i32, %arg1: i32) -> (i32, i32) {
    %c0_i32 = arith.constant 0 : i32
    %c0_i32_0 = arith.constant 0 : i32
    return %arg0, %c0_i32 : i32, i32
  }
  func.func @transform_1(%arg0: i32, %arg1: i32) -> (i32, i32) {
    %c0_i32 = arith.constant 0 : i32
    %c0_i32_0 = arith.constant 0 : i32
    return %arg1, %c0_i32 : i32, i32
  }
  func.func @transform_2(%arg0: i32, %arg1: i32) -> (i32, i32) {
    %c0_i32 = arith.constant 0 : i32
    %c0_i32_0 = arith.constant 0 : i32
    return %c0_i32, %arg1 : i32, i32
  }
  func.func @transform_3(%arg0: i32, %arg1: i32) -> (i32, i32) {
    %c0_i32 = arith.constant 0 : i32
    return %arg0, %arg1 : i32, i32
  }
}

</mosaic_0001>

<llo_original>
// kernel: feature_projection.1
$region0: #{feature_projection.1}
  #allocation0 [shape = 'u32[]', space=smem, size = 0x4, offset = 0x4, fixed_abs, tag = 'smem constant byte address 0x4 - core index']
  #allocation1 [shape = 'u32[144,128]{1,0:T(1,128)}', space=vmem, size = 0x12000, scoped, tag = 'internal scratch']
  %s0 = inlined_call_operand.vmem [shape: f32[16,128], index: 0, kind: input, shape index: {}]
  %s1 = inlined_call_operand.vmem [shape: f32[128,128], index: 1, kind: input, shape index: {}]
  %s2 = inlined_call_operand.vmem [shape: f32[1,128], index: 2, kind: input, shape index: {}]
  %s3 = inlined_call_operand.vmem [shape: f32[16,128], index: 3, kind: output, shape index: {}]
  %s4 = sld [smem:[#allocation0]]
  $region22: #{feature_projection.1} parent=0
    _
  %s6 = ssub.s32 1, %s4
  %s7 = scalar_select 0, %s6, %s4
  // Predicated region
  $region2: #{feature_projection.1} parent=0 // pred_check
    _
  $region3: #{feature_projection.1} parent=0 // pred_check_branch
    %9 = sbr.rel (0) target = $region5
  $region4: #{feature_projection.1} parent=0 // pred_region
    _
  $region5: #{feature_projection.1} parent=0 // pred_fallthru
    _
  // Predicated region
  $region6: #{feature_projection.1} parent=0 // pred_check
    _
  $region7: #{feature_projection.1} parent=0 // pred_check_branch
    %11 = sbr.rel (0) target = $region9
  $region8: #{feature_projection.1} parent=0 // pred_region
    _
  $region9: #{feature_projection.1} parent=0 // pred_fallthru
    _
  // Predicated region
  $region10: #{feature_projection.1} parent=0 // pred_check
    _
  $region11: #{feature_projection.1} parent=0 // pred_check_branch
    %13 = sbr.rel (0) target = $region13
  $region12: #{feature_projection.1} parent=0 // pred_region
    _
  $region13: #{feature_projection.1} parent=0 // pred_fallthru
    _
  %v14 = vld [vmem:[%s0] sm:$0xff]
  %v15 = vld [vmem:[%s0 + $0x8] sm:$0xff]
  %v16 = vld [vmem:[%s1] sm:$0xff]
  %v17 = vld [vmem:[%s1 + $0x8] sm:$0xff]
  %v18 = vld [vmem:[%s1 + $0x10] sm:$0xff]
  %v19 = vld [vmem:[%s1 + $0x18] sm:$0xff]
  %v20 = vld [vmem:[%s1 + $0x20] sm:$0xff]
  %v21 = vld [vmem:[%s1 + $0x28] sm:$0xff]
  %v22 = vld [vmem:[%s1 + $0x30] sm:$0xff]
  %v23 = vld [vmem:[%s1 + $0x38] sm:$0xff]
  %v24 = vld [vmem:[%s1 + $0x40] sm:$0xff]
  %v25 = vld [vmem:[%s1 + $0x48] sm:$0xff]
  %v26 = vld [vmem:[%s1 + $0x50] sm:$0xff]
  %v27 = vld [vmem:[%s1 + $0x58] sm:$0xff]
  %v28 = vld [vmem:[%s1 + $0x60] sm:$0xff]
  %v29 = vld [vmem:[%s1 + $0x68] sm:$0xff]
  %v30 = vld [vmem:[%s1 + $0x70] sm:$0xff]
  %v31 = vld [vmem:[%s1 + $0x78] sm:$0xff]
  %v32 = vld [vmem:[%s2] sm:$0x1]
  %v34 = vlaneseq
  %v35 = vshrl.u32 %v34, 7
  %v36 = vsub.s32 0, %v35
  %v37 = vrot.slane %v32, %v36
  %39 = vmatprep.subr.mxu0 0.0
  %40 = vmatpush1.xpose.msra.mxu0 %v31
  %41 = vmatprep.subr.mxu0 0.0
  %42 = vmatpush1.xpose.msra.mxu0 %v30
  %43 = vmatprep.subr.mxu0 0.0
  %44 = vmatpush1.xpose.msra.mxu0 %v29
  %45 = vmatprep.subr.mxu0 0.0
  %46 = vmatpush1.xpose.msra.mxu0 %v28
  %47 = vmatprep.subr.mxu0 0.0
  %48 = vmatpush1.xpose.msra.mxu0 %v27
  %49 = vmatprep.subr.mxu0 0.0
  %50 = vmatpush1.xpose.msra.mxu0 %v26
  %51 = vmatprep.subr.mxu0 0.0
  %52 = vmatpush1.xpose.msra.mxu0 %v25
  %53 = vmatprep.subr.mxu0 0.0
  %54 = vmatpush1.xpose.msra.mxu0 %v24
  %55 = vmatprep.subr.mxu0 0.0
  %56 = vmatpush1.xpose.msra.mxu0 %v23
  %57 = vmatprep.subr.mxu0 0.0
  %58 = vmatpush1.xpose.msra.mxu0 %v22
  %59 = vmatprep.subr.mxu0 0.0
  %60 = vmatpush1.xpose.msra.mxu0 %v21
  %61 = vmatprep.subr.mxu0 0.0
  %62 = vmatpush1.xpose.msra.mxu0 %v20
  %63 = vmatprep.subr.mxu0 0.0
  %64 = vmatpush1.xpose.msra.mxu0 %v19
  %65 = vmatprep.subr.mxu0 0.0
  %66 = vmatpush1.xpose.msra.mxu0 %v18
  %67 = vmatprep.subr.mxu0 0.0
  %68 = vmatpush1.xpose.msra.mxu0 %v17
  %69 = vmatprep.subr.mxu0 0.0
  %70 = vmatpush1.xpose.msra.mxu0 %v16
  %71 = vmatprep.subr.mxu0 0.0
  %72 = vmatpush2.xpose.msra.mxu0 0.0
  %73 = vmatprep.subr.mxu0 0.0
  %74 = vmatpush2.xpose.msra.mxu0 0.0
  %75 = vmatprep.subr.mxu0 0.0
  %76 = vmatpush2.xpose.msra.mxu0 0.0
  %77 = vmatprep.subr.mxu0 0.0
  %78 = vmatpush2.xpose.msra.mxu0 0.0
  %79 = vmatprep.subr.mxu0 0.0
  %80 = vmatpush2.xpose.msra.mxu0 0.0
  %81 = vmatprep.subr.mxu0 0.0
  %82 = vmatpush2.xpose.msra.mxu0 0.0
  %83 = vmatprep.subr.mxu0 0.0
  %84 = vmatpush2.xpose.msra.mxu0 0.0
  %85 = vmatprep.subr.mxu0 0.0
  %86 = vmatpush2.xpose.msra.mxu0 0.0
  %87 = vmatprep.subr.mxu0 0.0
  %88 = vmatpush2.xpose.msra.mxu0 0.0
  %89 = vmatprep.subr.mxu0 0.0
  %90 = vmatpush2.xpose.msra.mxu0 0.0
  %91 = vmatprep.subr.mxu0 0.0
  %92 = vmatpush2.xpose.msra.mxu0 0.0
  %93 = vmatprep.subr.mxu0 0.0
  %94 = vmatpush2.xpose.msra.mxu0 0.0
  %95 = vmatprep.subr.mxu0 0.0
  %96 = vmatpush2.xpose.msra.mxu0 0.0
  %97 = vmatprep.subr.mxu0 0.0
  %98 = vmatpush2.xpose.msra.mxu0 0.0
  %99 = vmatprep.subr.mxu0 0.0
  %100 = vmatpush2.xpose.msra.mxu0 0.0
  %101 = vmatprep.subr.mxu0 0.0
  %102 = vmatpush2.xpose.msra.mxu0 0.0
  %103 = vmatprep.mubr.f32.mxu0 0.0
  %104 = vmatmul.mubr.f32.gmra.mxu0 %v14
  %v105 = vpop.f32.mrf.mxu0
  %v106 = vadd.f32 %v37, %v105
  %v107 = vpop.f32.mrf.mxu0
  %108 = vmatprep.mubr.f32.mxu0 0.0
  %109 = vmatmul.mubr.f32.gmra.mxu0 %v15
  %v110 = vpop.f32.mrf.mxu0
  %v111 = vadd.f32 %v37, %v110
  %v112 = vpop.f32.mrf.mxu0
  %113 = vdwg.mxu0
  %114 = vst [vmem:[%s3] sm:$0xff] %v106
  %115 = vst [vmem:[%s3 + $0x8] sm:$0xff] %v111
  // Predicated region
  $region14: #{feature_projection.1} parent=0 // pred_check
    _
  $region15: #{feature_projection.1} parent=0 // pred_check_branch
    %117 = sbr.rel (0) target = $region17
  $region16: #{feature_projection.1} parent=0 // pred_region
    _
  $region17: #{feature_projection.1} parent=0 // pred_fallthru
    _
  // Predicated region
  $region18: #{feature_projection.1} parent=0 // pred_check
    _
  $region19: #{feature_projection.1} parent=0 // pred_check_branch
    %119 = sbr.rel (0) target = $region21
  $region20: #{feature_projection.1} parent=0 // pred_region
    _
  $region21: #{feature_projection.1} parent=0 // pred_fallthru
    _

</llo_original>
